<compile_context>
chip_gen: v6e
topology: v6e:2x2x1
jax: 0.10.0
libtpu: 0.0.40
codegen_flags: <defaults>
</compile_context>

<pallas_src>
import jax
import jax.numpy as jnp
from jax.experimental import pallas as pl
from jax.experimental.pallas import tpu as pltpu


def time_feature_embedding_kernel(x_ref, w_ref, o_ref):
    # x_ref: (TM, C)   w_ref: (C, D)   o_ref: (TM, D)
    o_ref[...] = jnp.dot(
        x_ref[...], w_ref[...], preferred_element_type=jnp.float32
    ).astype(o_ref.dtype)


def time_feature_embedding(x, w, *, row_tile=512):
    """x: (B, L, d_inp);  w: (d_inp, d_model) == torch Linear weight transposed."""
    B, L, C = x.shape
    C_w, D = w.shape
    assert C == C_w, "weight / input feature mismatch"

    M = B * L
    x2 = x.reshape(M, C)

    # One grid step per row tile; tiny inputs run as a single full-array step
    # (block == full array dims satisfies the (8,128) rule).
    tm = M if M <= row_tile else row_tile
    m_pad = pl.cdiv(M, tm) * tm
    if m_pad != M:
        x2 = jnp.pad(x2, ((0, m_pad - M), (0, 0)))

    out = pl.pallas_call(
        time_feature_embedding_kernel,
        out_shape=jax.ShapeDtypeStruct((m_pad, D), jnp.float32),
        grid=(m_pad // tm,),
        in_specs=[
            pl.BlockSpec((tm, C), lambda i: (i, 0)),   # row tile of x
            pl.BlockSpec((C, D), lambda i: (0, 0)),    # weight, resident across steps
        ],
        out_specs=pl.BlockSpec((tm, D), lambda i: (i, 0)),
        compiler_params=pltpu.CompilerParams(
            dimension_semantics=("parallel",),
        ),
        cost_estimate=pl.CostEstimate(
            flops=2 * m_pad * C * D,
            transcendentals=0,
            bytes_accessed=4 * (m_pad * C + C * D + m_pad * D),
        ),
    )(x2, w)

    return out[:M].reshape(B, L, D)


if __name__ == "__main__":
    # freq='h' -> d_inp = 4
    B, L, C, D = 2, 8, 4, 32

    key = jax.random.PRNGKey(0)
    kx, kw = jax.random.split(key)

    x = jax.random.normal(kx, (B, L, C), dtype=jnp.float32)
    # torch nn.Linear weight is (d_model, d_inp); store the transpose (d_inp, d_model)
    w = jax.random.normal(kw, (C, D), dtype=jnp.float32) * (1.0 / jnp.sqrt(C))

    out = jax.block_until_ready(time_feature_embedding(x, w))

    ref = x @ w  # Linear(bias=False)
    assert out.shape == (B, L, D)
    assert jnp.allclose(out, ref, atol=1e-5, rtol=1e-5), "mismatch vs reference"

    print("KERNEL_OK")
</pallas_src>

<mosaic_0001>
module attributes {stable_mosaic.version = 11 : i64} {
  func.func @time_feature_embedding_kernel(%arg0: i32, %arg1: memref<16x4xf32, #tpu.memory_space<vmem>>, %arg2: memref<4x32xf32, #tpu.memory_space<vmem>>, %arg3: memref<16x32xf32, #tpu.memory_space<vmem>>) attributes {dimension_semantics = [#tpu.dimension_semantics<parallel>], iteration_bounds = array<i64: 1>, scalar_prefetch = 0 : i64, scratch_operands = 0 : i64, tpu.core_type = #tpu.core_type<tc>, window_params = [{transform_indices = @transform_0, window_bounds = array<i64: 16, 4>}, {pipeline_mode = #tpu.pipeline_mode<synchronous>, transform_indices = @transform_1, window_bounds = array<i64: 4, 32>}, {transform_indices = @transform_2, window_bounds = array<i64: 16, 32>}]} {
    %c0 = arith.constant 0 : index
    %c0_0 = arith.constant 0 : index
    %0 = vector.load %arg1[%c0, %c0_0] : memref<16x4xf32, #tpu.memory_space<vmem>>, vector<16x4xf32>
    %c0_1 = arith.constant 0 : index
    %c0_2 = arith.constant 0 : index
    %1 = vector.load %arg2[%c0_1, %c0_2] : memref<4x32xf32, #tpu.memory_space<vmem>>, vector<4x32xf32>
    %cst = arith.constant dense<0.000000e+00> : vector<16x32xf32>
    %2 = tpu.matmul %0, %1, %cst {dimension_numbers = #tpu.dot_dimension_numbers<[1], [0], [0], [1], [0, 0, 1, 1], [], []>} : vector<16x4xf32>, vector<4x32xf32>, vector<16x32xf32> -> vector<16x32xf32>
    %c0_3 = arith.constant 0 : index
    %c0_4 = arith.constant 0 : index
    %3 = vector.load %arg3[%c0_3, %c0_4] : memref<16x32xf32, #tpu.memory_space<vmem>>, vector<16x32xf32>
    tpu.vector_store %arg3[%c0_3, %c0_4], %2 {strides = array<i32>} : memref<16x32xf32, #tpu.memory_space<vmem>>, vector<16x32xf32>,
    return
  }
  func.func @transform_0(%arg0: i32) -> (i32, i32) {
    %c0_i32 = arith.constant 0 : i32
    %c0_i32_0 = arith.constant 0 : i32
    return %arg0, %c0_i32 : i32, i32
  }
  func.func @transform_1(%arg0: i32) -> (i32, i32) {
    %c0_i32 = arith.constant 0 : i32
    %c0_i32_0 = arith.constant 0 : i32
    %c0_i32_1 = arith.constant 0 : i32
    return %c0_i32, %c0_i32_0 : i32, i32
  }
  func.func @transform_2(%arg0: i32) -> (i32, i32) {
    %c0_i32 = arith.constant 0 : i32
    %c0_i32_0 = arith.constant 0 : i32
    return %arg0, %c0_i32 : i32, i32
  }
}

</mosaic_0001>

<llo_original>
// kernel: tpu_custom_call.1
$region0: #{tpu_custom_call.1}
  #allocation0 [shape = 'u32[]', space=smem, size = 0x4, offset = 0x4, fixed_abs, tag = 'smem constant byte address 0x4 - core index']
  #allocation1 [shape = 'u32[144,128]{1,0:T(1,128)}', space=vmem, size = 0x12000, scoped, tag = 'internal scratch']
  %s0 = inlined_call_operand.vmem [shape: f32[16,4], index: 0, kind: input, shape index: {}]
  %s1 = inlined_call_operand.vmem [shape: f32[4,32], index: 1, kind: input, shape index: {}]
  %s2 = inlined_call_operand.hbm [shape: f32[16,32], index: 2, kind: output, shape index: {}]
  %s3 = sld [smem:[#allocation0]]
  $region18: #{tpu_custom_call.1} parent=0
    _
  %s5 = ssub.s32 1, %s3
  %s6 = scalar_select 0, %s5, %s3
  $region1: #{tpu_custom_call.1} parent=0
    #allocation2 [shape = 'u8[8192]{0}', space=vmem, size = 0x2000, scoped, tag = 'output window, operand 0, single buffered']
    #allocation3 [shape = 's32[1]{0}', space=sflag, size = 0x4, scoped, tag = 'scoped memory for tpu_custom_call.1']
    %7 = vsyncpa [#allocation3], 0
    // Predicated region
    $region2: #{tpu_custom_call.1} parent=1 // pred_check
      _
    $region3: #{tpu_custom_call.1} parent=1 // pred_check_branch
      %9 = sbr.rel (0) target = $region5
    $region4: #{tpu_custom_call.1} parent=1 // pred_region
      _
    $region5: #{tpu_custom_call.1} parent=1 // pred_fallthru
      _
    // Predicated region
    $region6: #{tpu_custom_call.1} parent=1 // pred_check
      _
    $region7: #{tpu_custom_call.1} parent=1 // pred_check_branch
      %11 = sbr.rel (0) target = $region9
    $region8: #{tpu_custom_call.1} parent=1 // pred_region
      _
    $region9: #{tpu_custom_call.1} parent=1 // pred_fallthru
      _
    %v12 = vld [vmem:[%s0] sm:$0xff]
    %v13 = vld [vmem:[%s0 + $0x8] sm:$0xff]
    %v14 = vld [vmem:[%s1] sm:$0xf]
    %vm15 = vcmask 31744
    %v17 = vsel %vm15, %v12, 0
    %v20 = vsel %vm15, %v13, 0
    %vm22 = vcmask 1043456
    %v24 = vsel %vm22, %v14, 0
    %26 = vmatprep.subr.mxu0 0.0
    %27 = vmatpush1.msra.mxu0 0.0
    %28 = vmatprep.subr.mxu0 0.0
    %29 = vmatpush1.msra.mxu0 0.0
    %30 = vmatprep.subr.mxu0 0.0
    %31 = vmatpush1.msra.mxu0 0.0
    %32 = vmatprep.subr.mxu0 0.0
    %33 = vmatpush1.msra.mxu0 0.0
    %34 = vmatprep.subr.mxu0 0.0
    %35 = vmatpush1.msra.mxu0 0.0
    %36 = vmatprep.subr.mxu0 0.0
    %37 = vmatpush1.msra.mxu0 0.0
    %38 = vmatprep.subr.mxu0 0.0
    %39 = vmatpush1.msra.mxu0 0.0
    %40 = vmatprep.subr.mxu0 0.0
    %41 = vmatpush1.msra.mxu0 0.0
    %42 = vmatprep.subr.mxu0 0.0
    %43 = vmatpush1.msra.mxu0 0.0
    %44 = vmatprep.subr.mxu0 0.0
    %45 = vmatpush1.msra.mxu0 0.0
    %46 = vmatprep.subr.mxu0 0.0
    %47 = vmatpush1.msra.mxu0 0.0
    %48 = vmatprep.subr.mxu0 0.0
    %49 = vmatpush1.msra.mxu0 0.0
    %50 = vmatprep.subr.mxu0 0.0
    %51 = vmatpush1.msra.mxu0 0.0
    %52 = vmatprep.subr.mxu0 0.0
    %53 = vmatpush1.msra.mxu0 0.0
    %54 = vmatprep.subr.mxu0 0.0
    %55 = vmatpush1.msra.mxu0 0.0
    %56 = vmatprep.subr.mxu0 0.0
    %57 = vmatpush1.msra.mxu0 %v24
    %58 = vmatprep.subr.mxu0 0.0
    %59 = vmatpush2.msra.mxu0 0.0
    %60 = vmatprep.subr.mxu0 0.0
    %61 = vmatpush2.msra.mxu0 0.0
    %62 = vmatprep.subr.mxu0 0.0
    %63 = vmatpush2.msra.mxu0 0.0
    %64 = vmatprep.subr.mxu0 0.0
    %65 = vmatpush2.msra.mxu0 0.0
    %66 = vmatprep.subr.mxu0 0.0
    %67 = vmatpush2.msra.mxu0 0.0
    %68 = vmatprep.subr.mxu0 0.0
    %69 = vmatpush2.msra.mxu0 0.0
    %70 = vmatprep.subr.mxu0 0.0
    %71 = vmatpush2.msra.mxu0 0.0
    %72 = vmatprep.subr.mxu0 0.0
    %73 = vmatpush2.msra.mxu0 0.0
    %74 = vmatprep.subr.mxu0 0.0
    %75 = vmatpush2.msra.mxu0 0.0
    %76 = vmatprep.subr.mxu0 0.0
    %77 = vmatpush2.msra.mxu0 0.0
    %78 = vmatprep.subr.mxu0 0.0
    %79 = vmatpush2.msra.mxu0 0.0
    %80 = vmatprep.subr.mxu0 0.0
    %81 = vmatpush2.msra.mxu0 0.0
    %82 = vmatprep.subr.mxu0 0.0
    %83 = vmatpush2.msra.mxu0 0.0
    %84 = vmatprep.subr.mxu0 0.0
    %85 = vmatpush2.msra.mxu0 0.0
    %86 = vmatprep.subr.mxu0 0.0
    %87 = vmatpush2.msra.mxu0 0.0
    %88 = vmatprep.subr.mxu0 0.0
    %89 = vmatpush2.msra.mxu0 0.0
    %90 = vmatprep.mubr.f32.mxu0 0.0
    %91 = vmatmul.mubr.f32.gmra.mxu0 %v17
    %v92 = vpop.f32.mrf.mxu0
    %v93 = vadd.f32 0.0, %v92
    %v94 = vpop.f32.mrf.mxu0
    %95 = vmatprep.mubr.f32.mxu0 0.0
    %96 = vmatmul.mubr.f32.gmra.mxu0 %v20
    %v97 = vpop.f32.mrf.mxu0
    %v98 = vadd.f32 0.0, %v97
    %v99 = vpop.f32.mrf.mxu0
    %100 = vdwg.mxu0
    %vm101 = vcmask 261120
    %102 = vst.msk [vmem:[#allocation2] sm:$0xff] %vm101, %v93
    %103 = vst.msk [vmem:[#allocation2 + $0x8] sm:$0xff] %vm101, %v98
    // Predicated region
    $region10: #{tpu_custom_call.1} parent=1 // pred_check
      _
    $region11: #{tpu_custom_call.1} parent=1 // pred_check_branch
      %105 = sbr.rel (0) target = $region13
    $region12: #{tpu_custom_call.1} parent=1 // pred_region
      %s107 = ssub.s32 256, 256
      %108 = vsyncadd [#allocation3], %s107
      %s109 = sshll.u32 [#allocation2], 4
      %s110 = int_to_ptr.vmem [resolvable:$true] %s109
      %115 = dma.vmem_to_hbm [thread:$0]  %s110, 256, %s2, [#allocation3], 128, 128, 8
    $region13: #{tpu_custom_call.1} parent=1 // pred_fallthru
      _
    // Predicated region
    $region14: #{tpu_custom_call.1} parent=1 // pred_check
      _
    $region15: #{tpu_custom_call.1} parent=1 // pred_check_branch
      %117 = sbr.rel (0) target = $region17
    $region16: #{tpu_custom_call.1} parent=1 // pred_region
      %118 = dma.done [#allocation3], 256
    $region17: #{tpu_custom_call.1} parent=1 // pred_fallthru
      _
    %119 = vsyncpa [#allocation3], 1

</llo_original>
